<compile_context>
chip_gen: v7x
topology: tpu7x:2x2x1
jax: 0.10.0
libtpu: 0.0.40
codegen_flags: <defaults>
</compile_context>

<pallas_src>
import functools
import math

import jax
import jax.numpy as jnp
from jax.experimental import pallas as pl
from jax.experimental.pallas import tpu as pltpu

_LOG_2PI = math.log(2.0 * math.pi)


def _fused_actor_critic_kernel(
    state_ref, action_ref, inv_var_ref, const_ref,
    w1_ref, b1_ref, w2_ref, b2_ref, w3_ref, b3_ref,
    out_ref, *, action_dim,
):
    A = action_dim
    x = state_ref[...]                                             # (TB, S)

    # Fused actor||critic MLP: 3 matmuls (128-lane dense) instead of 6.
    h = jnp.tanh(jnp.dot(x, w1_ref[...],
                         preferred_element_type=jnp.float32) + b1_ref[...])
    h = jnp.tanh(jnp.dot(h, w2_ref[...],
                         preferred_element_type=jnp.float32) + b2_ref[...])
    y = jnp.dot(h, w3_ref[...],
                preferred_element_type=jnp.float32) + b3_ref[...]  # (TB, A+1)

    mu = jnp.tanh(y[:, :A])            # actor head (tanh)
    value = y[:, A:A + 1]              # critic head (linear, no activation)

    # Diagonal-MVN log_prob; quad term as a tiny matmul against 1/var (MXU),
    # folding the inv_var multiply in for free. const = logdet + k*log(2*pi).
    diff = action_ref[...] - mu
    quad = jnp.dot(diff * diff, inv_var_ref[...],
                   preferred_element_type=jnp.float32)             # (TB, 1)
    logprob = -0.5 * (quad + const_ref[0, 0])

    # One coalesced output slab: [ mean (A) | logprob (1) | value (1) ].
    out_ref[...] = jnp.concatenate([mu, logprob, value], axis=-1)


def _pick_tile_b(B):
    # 256 fills the v6e/v7x MXU on the M side and is a multiple of 128 (v5e);
    # a few-hundred-row f32 tile is tiny vs. any VMEM limit (incl. v7x 64 MiB).
    if B >= 256:
        return 256
    return max(8, ((B + 7) // 8) * 8)   # single tile, f32 sublane aligned


def actor_critic_evaluate(state, action, action_var, params):
    """Fused actor/critic Pallas kernel.

    Returns (action_logprobs (B,), state_values (B,1), dist_entropy (B,),
             action_mean (B,A)).
    """
    B, S = state.shape
    A = action.shape[-1]
    f32 = jnp.float32

    wa1, ba1, wa2, ba2, wa3, ba3, wc1, bc1, wc2, bc2, wc3, bc3 = params
    H = wa1.shape[1]                    # 64

    # ---- fuse actor+critic weights (done once, outside the kernel) ----
    zHH = jnp.zeros((H, H), f32)
    w1 = jnp.concatenate([wa1, wc1], axis=1)                       # (S, 2H)
    b1 = jnp.concatenate([ba1, bc1], axis=1)                       # (1, 2H)
    w2 = jnp.block([[wa2, zHH], [zHH, wc2]])                       # (2H, 2H)
    b2 = jnp.concatenate([ba2, bc2], axis=1)                       # (1, 2H)
    w3 = jnp.block([[wa3, jnp.zeros((H, 1), f32)],
                    [jnp.zeros((H, A), f32), wc3]])                # (2H, A+1)
    b3 = jnp.concatenate([ba3, bc3], axis=1)                       # (1, A+1)

    # ---- batch-independent distribution constants (hoisted) ----
    inv_var = (1.0 / action_var).astype(f32).reshape(A, 1)
    logdet = jnp.sum(jnp.log(action_var)).astype(f32)
    logprob_const = (logdet + A * _LOG_2PI).reshape(1, 1)          # SMEM scalar
    entropy_scalar = 0.5 * (A * (1.0 + _LOG_2PI) + logdet)

    # ---- batch grid (double-buffered streaming of state/action) ----
    TILE_B = _pick_tile_b(B)
    nb = pl.cdiv(B, TILE_B)
    padded_B = nb * TILE_B
    if padded_B != B:
        pad = padded_B - B
        state = jnp.pad(state, ((0, pad), (0, 0)))
        action = jnp.pad(action, ((0, pad), (0, 0)))

    def resident(shape):                # full-extent, VMEM-resident across steps
        return pl.BlockSpec(shape, lambda i: (0, 0))

    slab = pl.pallas_call(
        functools.partial(_fused_actor_critic_kernel, action_dim=A),
        out_shape=jax.ShapeDtypeStruct((padded_B, A + 2), f32),
        grid=(nb,),
        in_specs=[
            pl.BlockSpec((TILE_B, S), lambda i: (i, 0)),           # state
            pl.BlockSpec((TILE_B, A), lambda i: (i, 0)),           # action
            resident((A, 1)),                                      # inv_var
            pl.BlockSpec((1, 1), lambda i: (0, 0),
                         memory_space=pltpu.MemorySpace.SMEM),     # logprob const
            resident((S, 2 * H)), resident((1, 2 * H)),            # fused layer 1
            resident((2 * H, 2 * H)), resident((1, 2 * H)),        # fused layer 2
            resident((2 * H, A + 1)), resident((1, A + 1)),        # fused layer 3
        ],
        out_specs=pl.BlockSpec((TILE_B, A + 2), lambda i: (i, 0)),
        compiler_params=pltpu.CompilerParams(
            dimension_semantics=("parallel",)),
    )(state, action, inv_var, logprob_const, w1, b1, w2, b2, w3, b3)

    slab = slab[:B]
    mean = slab[:, :A]
    logprob = slab[:, A]
    value = slab[:, A + 1:A + 2]
    entropy = jnp.full((B,), entropy_scalar, f32)   # batch-independent
    return logprob, value, entropy, mean


def init_params(key, state_dim, action_dim, hidden=64):
    """Deterministic synthetic Linear params, stored as (in, out) + (1, out)."""
    dims = [
        (state_dim, hidden), (hidden, hidden), (hidden, action_dim),  # actor
        (state_dim, hidden), (hidden, hidden), (hidden, 1),           # critic
    ]
    params = []
    for i, (fin, fout) in enumerate(dims):
        kw, kb = jax.random.split(jax.random.fold_in(key, i))
        bound = 1.0 / jnp.sqrt(jnp.float32(fin))
        w = jax.random.uniform(kw, (fin, fout), jnp.float32, -bound, bound)
        b = jax.random.uniform(kb, (1, fout), jnp.float32, -bound, bound)
        params += [w, b]
    return params


def reference_evaluate(state, action, action_var, params):
    wa1, ba1, wa2, ba2, wa3, ba3, wc1, bc1, wc2, bc2, wc3, bc3 = params
    h = jnp.tanh(state @ wa1 + ba1)
    h = jnp.tanh(h @ wa2 + ba2)
    mu = jnp.tanh(h @ wa3 + ba3)
    c = jnp.tanh(state @ wc1 + bc1)
    c = jnp.tanh(c @ wc2 + bc2)
    value = c @ wc3 + bc3
    k = action.shape[-1]
    log_two_pi = jnp.log(2.0 * jnp.pi)
    diff = action - mu
    quad = jnp.sum(diff * diff / action_var[None, :], axis=-1)
    logdet = jnp.sum(jnp.log(action_var))
    logprob = -0.5 * (quad + logdet + k * log_two_pi)
    entropy = jnp.full((state.shape[0],),
                       0.5 * (k * (1.0 + log_two_pi) + logdet))
    return logprob, value, entropy, mu


if __name__ == "__main__":
    B, STATE_DIM, ACTION_DIM = 8, 32, 4
    ACTION_STD_INIT = 0.6

    key = jax.random.PRNGKey(0)
    k_state, k_action, k_params = jax.random.split(key, 3)

    state = jax.random.normal(k_state, (B, STATE_DIM), jnp.float32)
    action = jax.random.normal(k_action, (B, ACTION_DIM), jnp.float32)
    action_var = jnp.full((ACTION_DIM,), ACTION_STD_INIT * ACTION_STD_INIT,
                          jnp.float32)
    params = init_params(k_params, STATE_DIM, ACTION_DIM)

    logprob, value, entropy, mean = jax.block_until_ready(
        actor_critic_evaluate(state, action, action_var, params))

    lp_ref, v_ref, ent_ref, mu_ref = reference_evaluate(
        state, action, action_var, params)

    assert jnp.allclose(mean, mu_ref, atol=1e-5), "action_mean mismatch"
    assert jnp.allclose(value, v_ref, atol=1e-5), "state_value mismatch"
    assert jnp.allclose(logprob, lp_ref, atol=1e-4), "log_prob mismatch"
    assert jnp.allclose(entropy, ent_ref, atol=1e-4), "entropy mismatch"

    print("KERNEL_OK")
</pallas_src>

<mosaic_0001>
module attributes {stable_mosaic.version = 11 : i64} {
  func.func @_fused_actor_critic_kernel(%arg0: i32, %arg1: memref<8x32xf32, #tpu.memory_space<vmem>>, %arg2: memref<8x4xf32, #tpu.memory_space<vmem>>, %arg3: memref<4x1xf32, #tpu.memory_space<vmem>>, %arg4: memref<1x1xf32, #tpu.memory_space<smem>>, %arg5: memref<32x128xf32, #tpu.memory_space<vmem>>, %arg6: memref<1x128xf32, #tpu.memory_space<vmem>>, %arg7: memref<128x128xf32, #tpu.memory_space<vmem>>, %arg8: memref<1x128xf32, #tpu.memory_space<vmem>>, %arg9: memref<128x5xf32, #tpu.memory_space<vmem>>, %arg10: memref<1x5xf32, #tpu.memory_space<vmem>>, %arg11: memref<8x6xf32, #tpu.memory_space<vmem>>) attributes {dimension_semantics = [#tpu.dimension_semantics<parallel>], iteration_bounds = array<i64: 1>, scalar_prefetch = 0 : i64, scratch_operands = 0 : i64, tpu.core_type = #tpu.core_type<tc>, window_params = [{transform_indices = @transform_0, window_bounds = array<i64: 8, 32>}, {transform_indices = @transform_1, window_bounds = array<i64: 8, 4>}, {pipeline_mode = #tpu.pipeline_mode<synchronous>, transform_indices = @transform_2, window_bounds = array<i64: 4, 1>}, {transform_indices = @transform_3, window_bounds = array<i64: 1, 1>}, {pipeline_mode = #tpu.pipeline_mode<synchronous>, transform_indices = @transform_4, window_bounds = array<i64: 32, 128>}, {pipeline_mode = #tpu.pipeline_mode<synchronous>, transform_indices = @transform_5, window_bounds = array<i64: 1, 128>}, {pipeline_mode = #tpu.pipeline_mode<synchronous>, transform_indices = @transform_6, window_bounds = array<i64: 128, 128>}, {pipeline_mode = #tpu.pipeline_mode<synchronous>, transform_indices = @transform_7, window_bounds = array<i64: 1, 128>}, {pipeline_mode = #tpu.pipeline_mode<synchronous>, transform_indices = @transform_8, window_bounds = array<i64: 128, 5>}, {pipeline_mode = #tpu.pipeline_mode<synchronous>, transform_indices = @transform_9, window_bounds = array<i64: 1, 5>}, {transform_indices = @transform_10, window_bounds = array<i64: 8, 6>}]} {
    %c0 = arith.constant 0 : index
    %c0_0 = arith.constant 0 : index
    %0 = vector.load %arg1[%c0, %c0_0] : memref<8x32xf32, #tpu.memory_space<vmem>>, vector<8x32xf32>
    %c0_1 = arith.constant 0 : index
    %c0_2 = arith.constant 0 : index
    %1 = vector.load %arg5[%c0_1, %c0_2] : memref<32x128xf32, #tpu.memory_space<vmem>>, vector<32x128xf32>
    %cst = arith.constant dense<0.000000e+00> : vector<8x128xf32>
    %2 = tpu.matmul %0, %1, %cst {dimension_numbers = #tpu.dot_dimension_numbers<[1], [0], [0], [1], [0, 0, 1, 1], [], []>} : vector<8x32xf32>, vector<32x128xf32>, vector<8x128xf32> -> vector<8x128xf32>
    %c0_3 = arith.constant 0 : index
    %c0_4 = arith.constant 0 : index
    %3 = vector.load %arg6[%c0_3, %c0_4] : memref<1x128xf32, #tpu.memory_space<vmem>>, vector<1x128xf32>
    %4 = vector.broadcast %3 : vector<1x128xf32> to vector<8x128xf32>
    %5 = arith.addf %2, %4 : vector<8x128xf32>
    %6 = math.tanh %5 : vector<8x128xf32>
    %c0_5 = arith.constant 0 : index
    %c0_6 = arith.constant 0 : index
    %7 = vector.load %arg7[%c0_5, %c0_6] : memref<128x128xf32, #tpu.memory_space<vmem>>, vector<128x128xf32>
    %cst_7 = arith.constant dense<0.000000e+00> : vector<8x128xf32>
    %8 = tpu.matmul %6, %7, %cst_7 {dimension_numbers = #tpu.dot_dimension_numbers<[1], [0], [0], [1], [0, 0, 1, 1], [], []>} : vector<8x128xf32>, vector<128x128xf32>, vector<8x128xf32> -> vector<8x128xf32>
    %c0_8 = arith.constant 0 : index
    %c0_9 = arith.constant 0 : index
    %9 = vector.load %arg8[%c0_8, %c0_9] : memref<1x128xf32, #tpu.memory_space<vmem>>, vector<1x128xf32>
    %10 = vector.broadcast %9 : vector<1x128xf32> to vector<8x128xf32>
    %11 = arith.addf %8, %10 : vector<8x128xf32>
    %12 = math.tanh %11 : vector<8x128xf32>
    %c0_10 = arith.constant 0 : index
    %c0_11 = arith.constant 0 : index
    %13 = vector.load %arg9[%c0_10, %c0_11] : memref<128x5xf32, #tpu.memory_space<vmem>>, vector<128x5xf32>
    %cst_12 = arith.constant dense<0.000000e+00> : vector<8x5xf32>
    %14 = tpu.matmul %12, %13, %cst_12 {dimension_numbers = #tpu.dot_dimension_numbers<[1], [0], [0], [1], [0, 0, 1, 1], [], []>} : vector<8x128xf32>, vector<128x5xf32>, vector<8x5xf32> -> vector<8x5xf32>
    %c0_13 = arith.constant 0 : index
    %c0_14 = arith.constant 0 : index
    %15 = vector.load %arg10[%c0_13, %c0_14] : memref<1x5xf32, #tpu.memory_space<vmem>>, vector<1x5xf32>
    %16 = vector.broadcast %15 : vector<1x5xf32> to vector<8x5xf32>
    %17 = arith.addf %14, %16 : vector<8x5xf32>
    %18 = vector.extract_strided_slice %17 {offsets = [0, 0], sizes = [8, 4], strides = [1, 1]} : vector<8x5xf32> to vector<8x4xf32>
    %19 = math.tanh %18 : vector<8x4xf32>
    %20 = vector.extract_strided_slice %17 {offsets = [0, 4], sizes = [8, 1], strides = [1, 1]} : vector<8x5xf32> to vector<8x1xf32>
    %c0_15 = arith.constant 0 : index
    %c0_16 = arith.constant 0 : index
    %21 = vector.load %arg2[%c0_15, %c0_16] : memref<8x4xf32, #tpu.memory_space<vmem>>, vector<8x4xf32>
    %22 = arith.subf %21, %19 : vector<8x4xf32>
    %23 = arith.mulf %22, %22 : vector<8x4xf32>
    %c0_17 = arith.constant 0 : index
    %c0_18 = arith.constant 0 : index
    %24 = vector.load %arg3[%c0_17, %c0_18] : memref<4x1xf32, #tpu.memory_space<vmem>>, vector<4x1xf32>
    %cst_19 = arith.constant dense<0.000000e+00> : vector<8x1xf32>
    %25 = tpu.matmul %23, %24, %cst_19 {dimension_numbers = #tpu.dot_dimension_numbers<[1], [0], [0], [1], [0, 0, 1, 1], [], []>} : vector<8x4xf32>, vector<4x1xf32>, vector<8x1xf32> -> vector<8x1xf32>
    %c0_20 = arith.constant 0 : index
    %c0_21 = arith.constant 0 : index
    %26 = memref.load %arg4[%c0_20, %c0_21] : memref<1x1xf32, #tpu.memory_space<smem>>
    %27 = vector.broadcast %26 : f32 to vector<8x1xf32>
    %28 = arith.addf %25, %27 : vector<8x1xf32>
    %cst_22 = arith.constant -5.000000e-01 : f32
    %29 = vector.broadcast %cst_22 : f32 to vector<8x1xf32>
    %30 = arith.mulf %29, %28 : vector<8x1xf32>
    %31 = tpu.concatenate %19, %30, %20 in 1 : vector<8x4xf32>, vector<8x1xf32>, vector<8x1xf32> -> vector<8x6xf32>
    %c0_23 = arith.constant 0 : index
    %c0_24 = arith.constant 0 : index
    %32 = vector.load %arg11[%c0_23, %c0_24] : memref<8x6xf32, #tpu.memory_space<vmem>>, vector<8x6xf32>
    tpu.vector_store %arg11[%c0_23, %c0_24], %31 {strides = array<i32>} : memref<8x6xf32, #tpu.memory_space<vmem>>, vector<8x6xf32>,
    return
  }
  func.func @transform_0(%arg0: i32) -> (i32, i32) {
    %c0_i32 = arith.constant 0 : i32
    %c0_i32_0 = arith.constant 0 : i32
    return %arg0, %c0_i32 : i32, i32
  }
  func.func @transform_1(%arg0: i32) -> (i32, i32) {
    %c0_i32 = arith.constant 0 : i32
    %c0_i32_0 = arith.constant 0 : i32
    return %arg0, %c0_i32 : i32, i32
  }
  func.func @transform_2(%arg0: i32) -> (i32, i32) {
    %c0_i32 = arith.constant 0 : i32
    %c0_i32_0 = arith.constant 0 : i32
    %c0_i32_1 = arith.constant 0 : i32
    return %c0_i32, %c0_i32_0 : i32, i32
  }
  func.func @transform_3(%arg0: i32) -> (i32, i32) {
    %c0_i32 = arith.constant 0 : i32
    %c0_i32_0 = arith.constant 0 : i32
    %c0_i32_1 = arith.constant 0 : i32
    return %c0_i32, %c0_i32_0 : i32, i32
  }
  func.func @transform_4(%arg0: i32) -> (i32, i32) {
    %c0_i32 = arith.constant 0 : i32
    %c0_i32_0 = arith.constant 0 : i32
    %c0_i32_1 = arith.constant 0 : i32
    return %c0_i32, %c0_i32_0 : i32, i32
  }
  func.func @transform_5(%arg0: i32) -> (i32, i32) {
    %c0_i32 = arith.constant 0 : i32
    %c0_i32_0 = arith.constant 0 : i32
    %c0_i32_1 = arith.constant 0 : i32
    return %c0_i32, %c0_i32_0 : i32, i32
  }
  func.func @transform_6(%arg0: i32) -> (i32, i32) {
    %c0_i32 = arith.constant 0 : i32
    %c0_i32_0 = arith.constant 0 : i32
    %c0_i32_1 = arith.constant 0 : i32
    return %c0_i32, %c0_i32_0 : i32, i32
  }
  func.func @transform_7(%arg0: i32) -> (i32, i32) {
    %c0_i32 = arith.constant 0 : i32
    %c0_i32_0 = arith.constant 0 : i32
    %c0_i32_1 = arith.constant 0 : i32
    return %c0_i32, %c0_i32_0 : i32, i32
  }
  func.func @transform_8(%arg0: i32) -> (i32, i32) {
    %c0_i32 = arith.constant 0 : i32
    %c0_i32_0 = arith.constant 0 : i32
    %c0_i32_1 = arith.constant 0 : i32
    return %c0_i32, %c0_i32_0 : i32, i32
  }
  func.func @transform_9(%arg0: i32) -> (i32, i32) {
    %c0_i32 = arith.constant 0 : i32
    %c0_i32_0 = arith.constant 0 : i32
    %c0_i32_1 = arith.constant 0 : i32
    return %c0_i32, %c0_i32_0 : i32, i32
  }
  func.func @transform_10(%arg0: i32) -> (i32, i32) {
    %c0_i32 = arith.constant 0 : i32
    %c0_i32_0 = arith.constant 0 : i32
    return %arg0, %c0_i32 : i32, i32
  }
}

</mosaic_0001>

<llo_original>
// kernel: tpu_custom_call.1
$region0: #{tpu_custom_call.1}
  #allocation0 [shape = 'u32[]', space=smem, size = 0x4, offset = 0x4, fixed_abs, tag = 'smem constant byte address 0x4 - core index']
  #allocation1 [shape = 'u32[144,128]{1,0:T(1,128)}', space=vmem, size = 0x12000, scoped, tag = 'internal scratch']
  #allocation2 [shape = 'f32[1,1]{1,0:T(1,128)S(6)}', space=smem, size = 0x200, scoped, tag = 'scoped memory for tpu_custom_call.1']
  %s0 = inlined_call_operand.vmem [shape: f32[8,32], index: 0, kind: input, shape index: {}]
  %s1 = inlined_call_operand.vmem [shape: f32[8,4], index: 1, kind: input, shape index: {}]
  %s2 = inlined_call_operand.vmem [shape: f32[4,1], index: 2, kind: input, shape index: {}]
  %s3 = inlined_call_operand.<no memory space> [shape: f32[1,1], index: 3, kind: input, shape index: {}]
  %s4 = inlined_call_operand.vmem [shape: f32[32,128], index: 4, kind: input, shape index: {}]
  %s5 = inlined_call_operand.vmem [shape: f32[1,128], index: 5, kind: input, shape index: {}]
  %s6 = inlined_call_operand.vmem [shape: f32[128,128], index: 6, kind: input, shape index: {}]
  %s7 = inlined_call_operand.vmem [shape: f32[1,128], index: 7, kind: input, shape index: {}]
  %s8 = inlined_call_operand.vmem [shape: f32[128,5], index: 8, kind: input, shape index: {}]
  %s9 = inlined_call_operand.vmem [shape: f32[1,5], index: 9, kind: input, shape index: {}]
  %s10 = inlined_call_operand.hbm [shape: f32[8,6], index: 10, kind: output, shape index: {}]
  %s11 = sld [smem:[#allocation0]]
  $region50: #{tpu_custom_call.1} parent=0
    _
  %s13 = ssub.s32 1, %s11
  %s14 = scalar_select 0, %s13, %s11
  %15 = sst [smem:[#allocation2]] %s3
  $region1: #{tpu_custom_call.1} parent=0
    #allocation3 [shape = 'u8[4096]{0}', space=vmem, size = 0x1000, scoped, tag = 'output window, operand 0, single buffered']
    #allocation4 [shape = 's32[1]{0}', space=sflag, size = 0x4, scoped, tag = 'scoped memory for tpu_custom_call.1']
    %16 = vsyncpa [#allocation4], 0
    // Predicated region
    $region2: #{tpu_custom_call.1} parent=1 // pred_check
      _
    $region3: #{tpu_custom_call.1} parent=1 // pred_check_branch
      %18 = sbr.rel (0) target = $region5
    $region4: #{tpu_custom_call.1} parent=1 // pred_region
      _
    $region5: #{tpu_custom_call.1} parent=1 // pred_fallthru
      _
    // Predicated region
    $region6: #{tpu_custom_call.1} parent=1 // pred_check
      _
    $region7: #{tpu_custom_call.1} parent=1 // pred_check_branch
      %20 = sbr.rel (0) target = $region9
    $region8: #{tpu_custom_call.1} parent=1 // pred_region
      _
    $region9: #{tpu_custom_call.1} parent=1 // pred_fallthru
      _
    // Predicated region
    $region10: #{tpu_custom_call.1} parent=1 // pred_check
      _
    $region11: #{tpu_custom_call.1} parent=1 // pred_check_branch
      %22 = sbr.rel (0) target = $region13
    $region12: #{tpu_custom_call.1} parent=1 // pred_region
      _
    $region13: #{tpu_custom_call.1} parent=1 // pred_fallthru
      _
    // Predicated region
    $region14: #{tpu_custom_call.1} parent=1 // pred_check
      _
    $region15: #{tpu_custom_call.1} parent=1 // pred_check_branch
      %24 = sbr.rel (0) target = $region17
    $region16: #{tpu_custom_call.1} parent=1 // pred_region
      _
    $region17: #{tpu_custom_call.1} parent=1 // pred_fallthru
      _
    // Predicated region
    $region18: #{tpu_custom_call.1} parent=1 // pred_check
      _
    $region19: #{tpu_custom_call.1} parent=1 // pred_check_branch
      %26 = sbr.rel (0) target = $region21
    $region20: #{tpu_custom_call.1} parent=1 // pred_region
      _
    $region21: #{tpu_custom_call.1} parent=1 // pred_fallthru
      _
    // Predicated region
    $region22: #{tpu_custom_call.1} parent=1 // pred_check
      _
    $region23: #{tpu_custom_call.1} parent=1 // pred_check_branch
      %28 = sbr.rel (0) target = $region25
    $region24: #{tpu_custom_call.1} parent=1 // pred_region
      _
    $region25: #{tpu_custom_call.1} parent=1 // pred_fallthru
      _
    // Predicated region
    $region26: #{tpu_custom_call.1} parent=1 // pred_check
      _
    $region27: #{tpu_custom_call.1} parent=1 // pred_check_branch
      %30 = sbr.rel (0) target = $region29
    $region28: #{tpu_custom_call.1} parent=1 // pred_region
      _
    $region29: #{tpu_custom_call.1} parent=1 // pred_fallthru
      _
    // Predicated region
    $region30: #{tpu_custom_call.1} parent=1 // pred_check
      _
    $region31: #{tpu_custom_call.1} parent=1 // pred_check_branch
      %32 = sbr.rel (0) target = $region33
    $region32: #{tpu_custom_call.1} parent=1 // pred_region
      _
    $region33: #{tpu_custom_call.1} parent=1 // pred_fallthru
      _
    // Predicated region
    $region34: #{tpu_custom_call.1} parent=1 // pred_check
      _
    $region35: #{tpu_custom_call.1} parent=1 // pred_check_branch
      %34 = sbr.rel (0) target = $region37
    $region36: #{tpu_custom_call.1} parent=1 // pred_region
      _
    $region37: #{tpu_custom_call.1} parent=1 // pred_fallthru
      _
    // Predicated region
    $region38: #{tpu_custom_call.1} parent=1 // pred_check
      _
    $region39: #{tpu_custom_call.1} parent=1 // pred_check_branch
      %36 = sbr.rel (0) target = $region41
    $region40: #{tpu_custom_call.1} parent=1 // pred_region
      _
    $region41: #{tpu_custom_call.1} parent=1 // pred_fallthru
      _
    %v37 = vld [vmem:[%s0] sm:$0xff]
    %v38 = vld [vmem:[%s4] sm:$0xff]
    %v39 = vld [vmem:[%s4 + $0x8] sm:$0xff]
    %v40 = vld [vmem:[%s4 + $0x10] sm:$0xff]
    %v41 = vld [vmem:[%s4 + $0x18] sm:$0xff]
    %v42 = vld [vmem:[%s5] sm:$0x1]
    %v44 = vlaneseq
    %v45 = vshrl.u32 %v44, 7
    %v46 = vsub.s32 0, %v45
    %v47 = vrot.slane %v42, %v46
    %vm49 = vcmask 261120
    %v51 = vsel %vm49, %v37, 0
    %53 = vmatprep.subr.mxu0 0.0
    %54 = vmatpush1.msra.mxu0 %v38
    %55 = vmatprep.subr.mxu0 0.0
    %56 = vmatpush1.msra.mxu0 %v39
    %57 = vmatprep.subr.mxu0 0.0
    %58 = vmatpush1.msra.mxu0 %v40
    %59 = vmatprep.subr.mxu0 0.0
    %60 = vmatpush1.msra.mxu0 %v41
    %61 = vmatprep.subr.mxu0 0.0
    %62 = vmatpush1.msra.mxu0 0.0
    %63 = vmatprep.subr.mxu0 0.0
    %64 = vmatpush1.msra.mxu0 0.0
    %65 = vmatprep.subr.mxu0 0.0
    %66 = vmatpush1.msra.mxu0 0.0
    %67 = vmatprep.subr.mxu0 0.0
    %68 = vmatpush1.msra.mxu0 0.0
    %69 = vmatprep.subr.mxu0 0.0
    %70 = vmatpush1.msra.mxu0 0.0
    %71 = vmatprep.subr.mxu0 0.0
    %72 = vmatpush1.msra.mxu0 0.0
    %73 = vmatprep.subr.mxu0 0.0
    %74 = vmatpush1.msra.mxu0 0.0
    %75 = vmatprep.subr.mxu0 0.0
    %76 = vmatpush1.msra.mxu0 0.0
    %77 = vmatprep.subr.mxu0 0.0
    %78 = vmatpush1.msra.mxu0 0.0
    %79 = vmatprep.subr.mxu0 0.0
    %80 = vmatpush1.msra.mxu0 0.0
    %81 = vmatprep.subr.mxu0 0.0
    %82 = vmatpush1.msra.mxu0 0.0
    %83 = vmatprep.subr.mxu0 0.0
    %84 = vmatpush1.msra.mxu0 0.0
    %85 = vmatprep.subr.mxu0 0.0
    %86 = vmatpush1.msra.mxu0 0.0
    %87 = vmatprep.subr.mxu0 0.0
    %88 = vmatpush1.msra.mxu0 0.0
    %89 = vmatprep.subr.mxu0 0.0
    %90 = vmatpush1.msra.mxu0 0.0
    %91 = vmatprep.subr.mxu0 0.0
    %92 = vmatpush1.msra.mxu0 0.0
    %93 = vmatprep.subr.mxu0 0.0
    %94 = vmatpush1.msra.mxu0 0.0
    %95 = vmatprep.subr.mxu0 0.0
    %96 = vmatpush1.msra.mxu0 0.0
    %97 = vmatprep.subr.mxu0 0.0
    %98 = vmatpush1.msra.mxu0 0.0
    %99 = vmatprep.subr.mxu0 0.0
    %100 = vmatpush1.msra.mxu0 0.0
    %101 = vmatprep.subr.mxu0 0.0
    %102 = vmatpush1.msra.mxu0 0.0
    %103 = vmatprep.subr.mxu0 0.0
    %104 = vmatpush1.msra.mxu0 0.0
    %105 = vmatprep.subr.mxu0 0.0
    %106 = vmatpush1.msra.mxu0 0.0
    %107 = vmatprep.subr.mxu0 0.0
    %108 = vmatpush1.msra.mxu0 0.0
    %109 = vmatprep.subr.mxu0 0.0
    %110 = vmatpush1.msra.mxu0 0.0
    %111 = vmatprep.subr.mxu0 0.0
    %112 = vmatpush1.msra.mxu0 0.0
    %113 = vmatprep.subr.mxu0 0.0
    %114 = vmatpush1.msra.mxu0 0.0
    %115 = vmatprep.subr.mxu0 0.0
    %116 = vmatpush1.msra.mxu0 0.0
    %117 = vmatprep.mubr.f32.mxu0 0.0
    %118 = vmatmul.mubr.f32.gmra.mrb[0].mxu0 %v51
    %v119 = vpop.f32.mrb[0].mxu0
    %v120 = vadd.f32 %v47, %v119
    %v121 = vpop.f32.mrb[0].mxu0
    %122 = vdwg.mxu0
    %v123 = vtanh.pop %v120
    %v124 = vld [vmem:[%s6] sm:$0xff]
    %v125 = vld [vmem:[%s6 + $0x8] sm:$0xff]
    %v126 = vld [vmem:[%s6 + $0x10] sm:$0xff]
    %v127 = vld [vmem:[%s6 + $0x18] sm:$0xff]
    %v128 = vld [vmem:[%s6 + $0x20] sm:$0xff]
    %v129 = vld [vmem:[%s6 + $0x28] sm:$0xff]
    %v130 = vld [vmem:[%s6 + $0x30] sm:$0xff]
    %v131 = vld [vmem:[%s6 + $0x38] sm:$0xff]
    %v132 = vld [vmem:[%s6 + $0x40] sm:$0xff]
    %v133 = vld [vmem:[%s6 + $0x48] sm:$0xff]
    %v134 = vld [vmem:[%s6 + $0x50] sm:$0xff]
    %v135 = vld [vmem:[%s6 + $0x58] sm:$0xff]
    %v136 = vld [vmem:[%s6 + $0x60] sm:$0xff]
    %v137 = vld [vmem:[%s6 + $0x68] sm:$0xff]
    %v138 = vld [vmem:[%s6 + $0x70] sm:$0xff]
    %v139 = vld [vmem:[%s6 + $0x78] sm:$0xff]
    %v140 = vld [vmem:[%s7] sm:$0x1]
    %v142 = vlaneseq
    %v143 = vshrl.u32 %v142, 7
    %v144 = vsub.s32 0, %v143
    %v145 = vrot.slane %v140, %v144
    %147 = vmatprep.subr.mxu0 0.0
    %148 = vmatpush1.msra.mxu0 %v124
    %149 = vmatprep.subr.mxu0 0.0
    %150 = vmatpush1.msra.mxu0 %v125
    %151 = vmatprep.subr.mxu0 0.0
    %152 = vmatpush1.msra.mxu0 %v126
    %153 = vmatprep.subr.mxu0 0.0
    %154 = vmatpush1.msra.mxu0 %v127
    %155 = vmatprep.subr.mxu0 0.0
    %156 = vmatpush1.msra.mxu0 %v128
    %157 = vmatprep.subr.mxu0 0.0
    %158 = vmatpush1.msra.mxu0 %v129
    %159 = vmatprep.subr.mxu0 0.0
    %160 = vmatpush1.msra.mxu0 %v130
    %161 = vmatprep.subr.mxu0 0.0
    %162 = vmatpush1.msra.mxu0 %v131
    %163 = vmatprep.subr.mxu0 0.0
    %164 = vmatpush1.msra.mxu0 %v132
    %165 = vmatprep.subr.mxu0 0.0
    %166 = vmatpush1.msra.mxu0 %v133
    %167 = vmatprep.subr.mxu0 0.0
    %168 = vmatpush1.msra.mxu0 %v134
    %169 = vmatprep.subr.mxu0 0.0
    %170 = vmatpush1.msra.mxu0 %v135
    %171 = vmatprep.subr.mxu0 0.0
    %172 = vmatpush1.msra.mxu0 %v136
    %173 = vmatprep.subr.mxu0 0.0
    %174 = vmatpush1.msra.mxu0 %v137
    %175 = vmatprep.subr.mxu0 0.0
    %176 = vmatpush1.msra.mxu0 %v138
    %177 = vmatprep.subr.mxu0 0.0
    %178 = vmatpush1.msra.mxu0 %v139
    %179 = vmatprep.subr.mxu0 0.0
    %180 = vmatpush1.msra.mxu0 0.0
    %181 = vmatprep.subr.mxu0 0.0
    %182 = vmatpush1.msra.mxu0 0.0
    %183 = vmatprep.subr.mxu0 0.0
    %184 = vmatpush1.msra.mxu0 0.0
    %185 = vmatprep.subr.mxu0 0.0
    %186 = vmatpush1.msra.mxu0 0.0
    %187 = vmatprep.subr.mxu0 0.0
    %188 = vmatpush1.msra.mxu0 0.0
    %189 = vmatprep.subr.mxu0 0.0
    %190 = vmatpush1.msra.mxu0 0.0
    %191 = vmatprep.subr.mxu0 0.0
    %192 = vmatpush1.msra.mxu0 0.0
    %193 = vmatprep.subr.mxu0 0.0
    %194 = vmatpush1.msra.mxu0 0.0
    %195 = vmatprep.subr.mxu0 0.0
    %196 = vmatpush1.msra.mxu0 0.0
    %197 = vmatprep.subr.mxu0 0.0
    %198 = vmatpush1.msra.mxu0 0.0
    %199 = vmatprep.subr.mxu0 0.0
    %200 = vmatpush1.msra.mxu0 0.0
    %201 = vmatprep.subr.mxu0 0.0
    %202 = vmatpush1.msra.mxu0 0.0
    %203 = vmatprep.subr.mxu0 0.0
    %204 = vmatpush1.msra.mxu0 0.0
    %205 = vmatprep.subr.mxu0 0.0
    %206 = vmatpush1.msra.mxu0 0.0
    %207 = vmatprep.subr.mxu0 0.0
    %208 = vmatpush1.msra.mxu0 0.0
    %209 = vmatprep.subr.mxu0 0.0
    %210 = vmatpush1.msra.mxu0 0.0
    %211 = vmatprep.mubr.f32.mxu0 0.0
    %212 = vmatmul.mubr.f32.gmra.mrb[0].mxu0 %v123
    %v213 = vpop.f32.mrb[0].mxu0
    %v214 = vadd.f32 %v145, %v213
    %v215 = vpop.f32.mrb[0].mxu0
    %216 = vdwg.mxu0
    %v217 = vtanh.pop %v214
    %v218 = vld [vmem:[%s8] sm:$0xff]
    %v219 = vld [vmem:[%s8 + $0x8] sm:$0xff]
    %v220 = vld [vmem:[%s8 + $0x10] sm:$0xff]
    %v221 = vld [vmem:[%s8 + $0x18] sm:$0xff]
    %v222 = vld [vmem:[%s8 + $0x20] sm:$0xff]
    %v223 = vld [vmem:[%s8 + $0x28] sm:$0xff]
    %v224 = vld [vmem:[%s8 + $0x30] sm:$0xff]
    %v225 = vld [vmem:[%s8 + $0x38] sm:$0xff]
    %v226 = vld [vmem:[%s8 + $0x40] sm:$0xff]
    %v227 = vld [vmem:[%s8 + $0x48] sm:$0xff]
    %v228 = vld [vmem:[%s8 + $0x50] sm:$0xff]
    %v229 = vld [vmem:[%s8 + $0x58] sm:$0xff]
    %v230 = vld [vmem:[%s8 + $0x60] sm:$0xff]
    %v231 = vld [vmem:[%s8 + $0x68] sm:$0xff]
    %v232 = vld [vmem:[%s8 + $0x70] sm:$0xff]
    %v233 = vld [vmem:[%s8 + $0x78] sm:$0xff]
    %v234 = vld [vmem:[%s9] sm:$0x1]
    %v236 = vlaneseq
    %v237 = vshrl.u32 %v236, 7
    %v238 = vsub.s32 0, %v237
    %v239 = vrot.slane %v234, %v238
    %241 = vmatprep.subr.mxu0 0.0
    %242 = vmatpush1.msra.mxu0 %v218
    %243 = vmatprep.subr.mxu0 0.0
    %244 = vmatpush1.msra.mxu0 %v219
    %245 = vmatprep.subr.mxu0 0.0
    %246 = vmatpush1.msra.mxu0 %v220
    %247 = vmatprep.subr.mxu0 0.0
    %248 = vmatpush1.msra.mxu0 %v221
    %249 = vmatprep.subr.mxu0 0.0
    %250 = vmatpush1.msra.mxu0 %v222
    %251 = vmatprep.subr.mxu0 0.0
    %252 = vmatpush1.msra.mxu0 %v223
    %253 = vmatprep.subr.mxu0 0.0
    %254 = vmatpush1.msra.mxu0 %v224
    %255 = vmatprep.subr.mxu0 0.0
    %256 = vmatpush1.msra.mxu0 %v225
    %257 = vmatprep.subr.mxu0 0.0
    %258 = vmatpush1.msra.mxu0 %v226
    %259 = vmatprep.subr.mxu0 0.0
    %260 = vmatpush1.msra.mxu0 %v227
    %261 = vmatprep.subr.mxu0 0.0
    %262 = vmatpush1.msra.mxu0 %v228
    %263 = vmatprep.subr.mxu0 0.0
    %264 = vmatpush1.msra.mxu0 %v229
    %265 = vmatprep.subr.mxu0 0.0
    %266 = vmatpush1.msra.mxu0 %v230
    %267 = vmatprep.subr.mxu0 0.0
    %268 = vmatpush1.msra.mxu0 %v231
    %269 = vmatprep.subr.mxu0 0.0
    %270 = vmatpush1.msra.mxu0 %v232
    %271 = vmatprep.subr.mxu0 0.0
    %272 = vmatpush1.msra.mxu0 %v233
    %273 = vmatprep.subr.mxu0 0.0
    %274 = vmatpush1.msra.mxu0 0.0
    %275 = vmatprep.subr.mxu0 0.0
    %276 = vmatpush1.msra.mxu0 0.0
    %277 = vmatprep.subr.mxu0 0.0
    %278 = vmatpush1.msra.mxu0 0.0
    %279 = vmatprep.subr.mxu0 0.0
    %280 = vmatpush1.msra.mxu0 0.0
    %281 = vmatprep.subr.mxu0 0.0
    %282 = vmatpush1.msra.mxu0 0.0
    %283 = vmatprep.subr.mxu0 0.0
    %284 = vmatpush1.msra.mxu0 0.0
    %285 = vmatprep.subr.mxu0 0.0
    %286 = vmatpush1.msra.mxu0 0.0
    %287 = vmatprep.subr.mxu0 0.0
    %288 = vmatpush1.msra.mxu0 0.0
    %289 = vmatprep.subr.mxu0 0.0
    %290 = vmatpush1.msra.mxu0 0.0
    %291 = vmatprep.subr.mxu0 0.0
    %292 = vmatpush1.msra.mxu0 0.0
    %293 = vmatprep.subr.mxu0 0.0
    %294 = vmatpush1.msra.mxu0 0.0
    %295 = vmatprep.subr.mxu0 0.0
    %296 = vmatpush1.msra.mxu0 0.0
    %297 = vmatprep.subr.mxu0 0.0
    %298 = vmatpush1.msra.mxu0 0.0
    %299 = vmatprep.subr.mxu0 0.0
    %300 = vmatpush1.msra.mxu0 0.0
    %301 = vmatprep.subr.mxu0 0.0
    %302 = vmatpush1.msra.mxu0 0.0
    %303 = vmatprep.subr.mxu0 0.0
    %304 = vmatpush1.msra.mxu0 0.0
    %305 = vmatprep.mubr.f32.mxu0 0.0
    %306 = vmatmul.mubr.f32.gmra.mrb[0].mxu0 %v217
    %v307 = vpop.f32.mrb[0].mxu0
    %v308 = vadd.f32 %v239, %v307
    %v309 = vpop.f32.mrb[0].mxu0
    %310 = vdwg.mxu0
    %v311 = vtanh.pop %v308
    %v312 = vld [vmem:[%s1] sm:$0xff]
    %v313 = vsub.f32 %v312, %v311
    %v314 = vmul.f32 %v313, %v313
    %v315 = vld [vmem:[%s2] sm:$0xf]
    %s316 = sld [smem:[#allocation2]]
    %v317 = vstv %s316
    %vm318 = vcmask 31744
    %v320 = vsel %vm318, %v314, 0
    %vm322 = vcmask 1043456
    %v324 = vsel %vm322, %v315, 0
    %326 = vmatprep.subr.mxu0 0.0
    %327 = vmatpush1.msra.mxu0 %v324
    %328 = vmatprep.subr.mxu0 0.0
    %329 = vmatpush1.msra.mxu0 0.0
    %330 = vmatprep.subr.mxu0 0.0
    %331 = vmatpush1.msra.mxu0 0.0
    %332 = vmatprep.subr.mxu0 0.0
    %333 = vmatpush1.msra.mxu0 0.0
    %334 = vmatprep.subr.mxu0 0.0
    %335 = vmatpush1.msra.mxu0 0.0
    %336 = vmatprep.subr.mxu0 0.0
    %337 = vmatpush1.msra.mxu0 0.0
    %338 = vmatprep.subr.mxu0 0.0
    %339 = vmatpush1.msra.mxu0 0.0
    %340 = vmatprep.subr.mxu0 0.0
    %341 = vmatpush1.msra.mxu0 0.0
    %342 = vmatprep.subr.mxu0 0.0
    %343 = vmatpush1.msra.mxu0 0.0
    %344 = vmatprep.subr.mxu0 0.0
    %345 = vmatpush1.msra.mxu0 0.0
    %346 = vmatprep.subr.mxu0 0.0
    %347 = vmatpush1.msra.mxu0 0.0
    %348 = vmatprep.subr.mxu0 0.0
    %349 = vmatpush1.msra.mxu0 0.0
    %350 = vmatprep.subr.mxu0 0.0
    %351 = vmatpush1.msra.mxu0 0.0
    %352 = vmatprep.subr.mxu0 0.0
    %353 = vmatpush1.msra.mxu0 0.0
    %354 = vmatprep.subr.mxu0 0.0
    %355 = vmatpush1.msra.mxu0 0.0
    %356 = vmatprep.subr.mxu0 0.0
    %357 = vmatpush1.msra.mxu0 0.0
    %358 = vmatprep.subr.mxu0 0.0
    %359 = vmatpush1.msra.mxu0 0.0
    %360 = vmatprep.subr.mxu0 0.0
    %361 = vmatpush1.msra.mxu0 0.0
    %362 = vmatprep.subr.mxu0 0.0
    %363 = vmatpush1.msra.mxu0 0.0
    %364 = vmatprep.subr.mxu0 0.0
    %365 = vmatpush1.msra.mxu0 0.0
    %366 = vmatprep.subr.mxu0 0.0
    %367 = vmatpush1.msra.mxu0 0.0
    %368 = vmatprep.subr.mxu0 0.0
    %369 = vmatpush1.msra.mxu0 0.0
    %370 = vmatprep.subr.mxu0 0.0
    %371 = vmatpush1.msra.mxu0 0.0
    %372 = vmatprep.subr.mxu0 0.0
    %373 = vmatpush1.msra.mxu0 0.0
    %374 = vmatprep.subr.mxu0 0.0
    %375 = vmatpush1.msra.mxu0 0.0
    %376 = vmatprep.subr.mxu0 0.0
    %377 = vmatpush1.msra.mxu0 0.0
    %378 = vmatprep.subr.mxu0 0.0
    %379 = vmatpush1.msra.mxu0 0.0
    %380 = vmatprep.subr.mxu0 0.0
    %381 = vmatpush1.msra.mxu0 0.0
    %382 = vmatprep.subr.mxu0 0.0
    %383 = vmatpush1.msra.mxu0 0.0
    %384 = vmatprep.subr.mxu0 0.0
    %385 = vmatpush1.msra.mxu0 0.0
    %386 = vmatprep.subr.mxu0 0.0
    %387 = vmatpush1.msra.mxu0 0.0
    %388 = vmatprep.subr.mxu0 0.0
    %389 = vmatpush1.msra.mxu0 0.0
    %390 = vmatprep.mubr.f32.mxu0 0.0
    %391 = vmatmul.mubr.f32.gmra.mrb[0].mxu0 %v320
    %v392 = vpop.f32.mrb[0].mxu0
    %v393 = vadd.f32 %v317, %v392
    %v394 = vpop.f32.mrb[0].mxu0
    %395 = vdwg.mxu0
    %v396 = vmul.f32 %v393, -0.5
    %398 = vrot.lane.b32.xlu0 %v396, 4
    %v399 = vpop.permute.xlu0 %398
    %402 = vrot.lane.b32.xlu0 %v308, 1
    %v403 = vpop.permute.xlu0 %402
    %v405 = vsel %vm318, %v311, %v399
    %vm406 = vcmask 39936
    %v407 = vsel %vm406, %v405, %v403
    %vm408 = vcmask 48128
    %409 = vst.msk [vmem:[#allocation3] sm:$0xff] %vm408, %v407
    // Predicated region
    $region42: #{tpu_custom_call.1} parent=1 // pred_check
      _
    $region43: #{tpu_custom_call.1} parent=1 // pred_check_branch
      %411 = sbr.rel (0) target = $region45
    $region44: #{tpu_custom_call.1} parent=1 // pred_region
      %s413 = ssub.s32 128, 128
      %414 = vsyncadd [#allocation4], %s413
      %s416 = sshll.u32 [#allocation3], 4
      %s417 = int_to_ptr.vmem [resolvable:$true] %s416
      %419 = dma.vmem_to_hbm [thread:$0]  %s417, 128, %s10, [#allocation4]
    $region45: #{tpu_custom_call.1} parent=1 // pred_fallthru
      _
    // Predicated region
    $region46: #{tpu_custom_call.1} parent=1 // pred_check
      _
    $region47: #{tpu_custom_call.1} parent=1 // pred_check_branch
      %421 = sbr.rel (0) target = $region49
    $region48: #{tpu_custom_call.1} parent=1 // pred_region
      %422 = dma.done [#allocation4], 128
    $region49: #{tpu_custom_call.1} parent=1 // pred_fallthru
      _
    %423 = vsyncpa [#allocation4], 1

</llo_original>
